<compile_context>
chip_gen: v7x
topology: tpu7x:2x2x1
jax: 0.10.0
libtpu: 0.0.40
codegen_flags: <defaults>
</compile_context>

<pallas_src>
import functools
import math

import jax
import jax.numpy as jnp
import numpy as np
from jax.experimental import pallas as pl
from jax.experimental.pallas import tpu as pltpu


# Chebyshev polynomials T_m(x) = cos(m * theta), same as the torch mfunc list.
_MFUNC = [
    lambda x: jnp.ones_like(x),
    lambda x: x,
    lambda x: 2.0 * x ** 2 - 1.0,
    lambda x: 4.0 * x ** 3 - 3.0 * x,
    lambda x: 8.0 * x ** 4 - 8.0 * x ** 2 + 1.0,
    lambda x: 16.0 * x ** 5 - 20.0 * x ** 3 + 5.0 * x,
]

_VMEM_TILE_BUDGET = 20 * 1024 * 1024   # leave headroom vs 32 MiB scoped default


def _round_up(x, m):
    return ((x + m - 1) // m) * m


def _tile_vmem_bytes(tb, tc, D):
    # double-buffered f32 tiles: x (tb,D), w_t (tb,D), weight (D,tc), out (tb,tc)
    return 8 * (2 * tb * D + D * tc + tb * tc)


def _pick_tiles(B, C, D, tb, tc):
    if tb is None:
        tb = min(512, _round_up(B, 8))
    if tc is None:
        tc = min(512, _round_up(C, 128))
    assert tb % 8 == 0 and tc % 128 == 0
    # Shrink tiles (tc first: it does not affect weight re-streaming) until the
    # double-buffered footprint fits the VMEM budget.
    while _tile_vmem_bytes(tb, tc, D) > _VMEM_TILE_BUDGET:
        if tc > 128:
            tc = max(128, (tc // 2) // 128 * 128)
        elif tb > 8:
            tb = max(8, (tb // 2) // 8 * 8)
        else:
            break
    return tb, tc


def _asoftmax_kernel(lam_ref, tgt_ref, x_ref, w_ref, wt_ref, o_ref, *, margin, tc):
    """Computes one (tb, tc) output tile."""
    j = pl.program_id(1)                       # class-tile index
    lam = lam_ref[0]                           # scalar lambda (SMEM)

    x = x_ref[...]                             # (tb, D) f32
    w = w_ref[...]                             # (D, tc) f32, un-normalized

    # Column normalization folded into a post-matmul scale:
    #   x @ (W / ||W||_col)  ==  (x @ W) * (1 / ||W||_col)
    col_sq = jnp.sum(w * w, axis=0, keepdims=True)                 # (1, tc)
    inv_col = jax.lax.rsqrt(jnp.maximum(col_sq, 1e-24))            # F.normalize eps
    logits = jnp.dot(x, w, preferred_element_type=jnp.float32) * inv_col   # (tb, tc)

    # ---- per-row target math (independent of class tile; cheap recompute) ----
    wt = wt_ref[...]                                               # (tb, D) target cols
    x_norm = jnp.sqrt(jnp.sum(x * x, axis=1, keepdims=True))       # (tb, 1)
    wt_sq = jnp.sum(wt * wt, axis=1, keepdims=True)                # (tb, 1)
    inv_wt = jax.lax.rsqrt(jnp.maximum(wt_sq, 1e-24))
    logits_yi = jnp.sum(x * wt, axis=1, keepdims=True) * inv_wt    # x . W_norm[:, y]

    # ||W_norm[:, y]|| == 1, so the reference's Wyi_norm factor is dropped.
    cos_theta = logits_yi / (x_norm + 1e-10)

    cos_m_theta = _MFUNC[margin](cos_theta)                        # cos(m * theta)

    # k = floor(m * acos(clip(cos)) / pi) without acos:
    #   m*theta/pi >= t  <=>  cos_theta <= cos(t*pi/m)   (acos monotone decreasing)
    eps = 1e-7
    cos_c = jnp.clip(cos_theta, -1.0 + eps, 1.0 - eps)
    k = jnp.zeros_like(cos_c)
    for t in range(1, margin):
        k = k + (cos_c <= math.cos(t * math.pi / margin)).astype(jnp.float32)

    sign = 1.0 - 2.0 * jnp.mod(k, 2.0)                             # (-1)^k
    psi_theta = sign * cos_m_theta - 2.0 * k
    fyi = (x_norm * psi_theta + lam * x_norm * cos_theta) / (1.0 + lam)   # (tb, 1)

    # ---- scatter f_yi into the target column of this class tile --------------
    class_ids = jax.lax.broadcasted_iota(jnp.int32, logits.shape, 1) + j * tc
    mask = class_ids == tgt_ref[...]                               # (tb, tc)
    o_ref[...] = jnp.where(mask, jnp.broadcast_to(fyi, logits.shape), logits)


def asoftmax_linear_forward(inputs, weight, targets, lambdas, margin,
                            *, tb=None, tc=None):
    """Pallas forward of ASoftmaxLinear.

    inputs:  (B, D) float32
    weight:  (D, C) float32 (un-normalized, as stored)
    targets: (B,) int
    lambdas: python float (annealing coefficient from `it`)
    margin:  python int in [0, 5]
    """
    B, D = inputs.shape
    Dw, C = weight.shape
    assert Dw == D

    tb, tc = _pick_tiles(B, C, D, tb, tc)

    b_pad = _round_up(B, tb)
    c_pad = _round_up(C, tc)

    x = inputs.astype(jnp.float32)
    w = weight.astype(jnp.float32)
    tgt = jnp.asarray(targets, dtype=jnp.int32)

    # Gather the per-row target class columns once, outside the class-tiled
    # loop (O(B*D), done by XLA): (B, D).
    w_t = jnp.take(w, tgt, axis=1).T

    if b_pad != B:
        x = jnp.pad(x, ((0, b_pad - B), (0, 0)))
        w_t = jnp.pad(w_t, ((0, b_pad - B), (0, 0)))
        tgt = jnp.pad(tgt, (0, b_pad - B), constant_values=-1)
    if c_pad != C:
        w = jnp.pad(w, ((0, 0), (0, c_pad - C)))

    tgt2 = tgt.reshape(b_pad, 1)
    lam_arr = jnp.asarray([lambdas], dtype=jnp.float32)

    grid = (b_pad // tb, c_pad // tc)
    kernel = functools.partial(_asoftmax_kernel, margin=margin, tc=tc)

    vmem_need = _tile_vmem_bytes(tb, tc, D) + (1 << 20)
    vmem_limit = min(max(vmem_need, 32 * 1024 * 1024), 64 * 1024 * 1024)

    out = pl.pallas_call(
        kernel,
        out_shape=jax.ShapeDtypeStruct((b_pad, c_pad), jnp.float32),
        grid=grid,
        in_specs=[
            pl.BlockSpec(memory_space=pltpu.MemorySpace.SMEM),      # lambda scalar
            pl.BlockSpec((tb, 1), lambda i, j: (i, 0)),             # targets
            pl.BlockSpec((tb, D), lambda i, j: (i, 0)),             # inputs
            pl.BlockSpec((D, tc), lambda i, j: (0, j)),             # weight (streamed)
            pl.BlockSpec((tb, D), lambda i, j: (i, 0)),             # target columns
        ],
        out_specs=pl.BlockSpec((tb, tc), lambda i, j: (i, j)),
        compiler_params=pltpu.CompilerParams(
            dimension_semantics=("parallel", "parallel"),
            vmem_limit_bytes=vmem_limit,
        ),
        cost_estimate=pl.CostEstimate(
            flops=2 * b_pad * D * c_pad,
            transcendentals=0,
            bytes_accessed=4 * ((b_pad // tb) * D * c_pad      # weight re-streamed per row tile
                                + 2 * b_pad * D                # x + gathered target cols
                                + b_pad * c_pad),              # output
        ),
    )(lam_arr, tgt2, x, w, w_t)

    return out[:B, :C]


class ASoftmaxLinearJax:
    """Mirrors the torch module's python-side state (it counter, lambdas)."""

    def __init__(self, feat_dim, num_classes, margin, key):
        self.margin = margin
        self.it = 0
        self.lambdas_min = 5
        self.lambdas_max = 1500
        # xavier_uniform_ for a (feat_dim, num_classes) matrix
        bound = math.sqrt(6.0 / (feat_dim + num_classes))
        self.weight = jax.random.uniform(
            key, (feat_dim, num_classes), jnp.float32, -bound, bound)

    def __call__(self, inputs, targets, **tile_kwargs):
        self.it += 1
        lambdas = max(self.lambdas_min, self.lambdas_max / (1 + 0.1 * self.it))
        return asoftmax_linear_forward(inputs, self.weight, targets,
                                       float(lambdas), self.margin, **tile_kwargs)


def _reference_forward(inputs, weight, targets, lambdas, margin):
    """Pure-JAX reference replicating the torch code path (uses arccos)."""
    w_n = weight / jnp.maximum(
        jnp.sqrt(jnp.sum(weight * weight, axis=0, keepdims=True)), 1e-12)
    logits = inputs @ w_n
    idx = jnp.arange(logits.shape[0])
    logits_yi = logits[idx, targets]
    wyi_norm = jnp.linalg.norm(w_n[:, targets], axis=0)
    x_norm = jnp.linalg.norm(inputs, axis=1)
    cos = logits_yi / (wyi_norm * x_norm + 1e-10)
    cos_m = _MFUNC[margin](cos)
    eps = 1e-7
    theta = jnp.arccos(jnp.clip(cos, -1 + eps, 1 - eps))
    k = jnp.floor(margin * theta / math.pi)
    psi = (-1.0) ** k * cos_m - 2.0 * k
    fyi = (x_norm * psi + lambdas * x_norm * cos) / (1.0 + lambdas)
    return logits.at[idx, targets].set(fyi)


if __name__ == "__main__":
    # Small demo shapes, chosen so the grid has >1 tile along both axes with
    # tb=8, tc=128 (grid = (2, 3), classes padded 300 -> 384).
    B, FEAT_DIM, NUM_CLASSES, MARGIN = 16, 32, 300, 4

    key = jax.random.PRNGKey(0)
    k_w, k_x, k_t = jax.random.split(key, 3)

    layer = ASoftmaxLinearJax(FEAT_DIM, NUM_CLASSES, MARGIN, k_w)
    x = jax.random.normal(k_x, (B, FEAT_DIM), jnp.float32)
    targets = jax.random.randint(k_t, (B,), 0, NUM_CLASSES)

    out = layer(x, targets, tb=8, tc=128)
    out = jax.block_until_ready(out)

    # Correctness check vs pure-JAX reference (same it/lambdas as the call above).
    lambdas = max(layer.lambdas_min, layer.lambdas_max / (1 + 0.1 * layer.it))
    ref = _reference_forward(x, layer.weight, targets, float(lambdas), MARGIN)
    np.testing.assert_allclose(np.asarray(out), np.asarray(ref),
                               rtol=1e-4, atol=1e-4)

    # Also exercise the auto-picked (larger) tiles once.
    out2 = asoftmax_linear_forward(x, layer.weight, targets, float(lambdas), MARGIN)
    out2 = jax.block_until_ready(out2)
    np.testing.assert_allclose(np.asarray(out2), np.asarray(ref),
                               rtol=1e-4, atol=1e-4)

    print("KERNEL_OK")
</pallas_src>

<mosaic_0001>
module attributes {stable_mosaic.version = 11 : i64} {
  func.func @_asoftmax_kernel(%arg0: i32, %arg1: i32, %arg2: memref<1xf32, #tpu.memory_space<smem>>, %arg3: memref<8x1xi32, #tpu.memory_space<vmem>>, %arg4: memref<8x32xf32, #tpu.memory_space<vmem>>, %arg5: memref<32x128xf32, #tpu.memory_space<vmem>>, %arg6: memref<8x32xf32, #tpu.memory_space<vmem>>, %arg7: memref<8x128xf32, #tpu.memory_space<vmem>>) attributes {dimension_semantics = [#tpu.dimension_semantics<parallel>, #tpu.dimension_semantics<parallel>], iteration_bounds = array<i64: 2, 3>, scalar_prefetch = 0 : i64, scratch_operands = 0 : i64, tpu.core_type = #tpu.core_type<tc>, window_params = [{transform_indices = @transform_0, window_bounds = array<i64: 1>}, {transform_indices = @transform_1, window_bounds = array<i64: 8, 1>}, {transform_indices = @transform_2, window_bounds = array<i64: 8, 32>}, {transform_indices = @transform_3, window_bounds = array<i64: 32, 128>}, {transform_indices = @transform_4, window_bounds = array<i64: 8, 32>}, {transform_indices = @transform_5, window_bounds = array<i64: 8, 128>}]} {
    %c0 = arith.constant 0 : index
    %0 = memref.load %arg2[%c0] : memref<1xf32, #tpu.memory_space<smem>>
    %c0_0 = arith.constant 0 : index
    %c0_1 = arith.constant 0 : index
    %1 = vector.load %arg4[%c0_0, %c0_1] : memref<8x32xf32, #tpu.memory_space<vmem>>, vector<8x32xf32>
    %c0_2 = arith.constant 0 : index
    %c0_3 = arith.constant 0 : index
    %2 = vector.load %arg5[%c0_2, %c0_3] : memref<32x128xf32, #tpu.memory_space<vmem>>, vector<32x128xf32>
    %3 = arith.mulf %2, %2 : vector<32x128xf32>
    %cst = arith.constant dense<0.000000e+00> : vector<128xf32>
    %4 = vector.multi_reduction <add>, %3, %cst [0] : vector<32x128xf32> to vector<128xf32>
    %5 = vector.shape_cast %4 : vector<128xf32> to vector<1x128xf32>
    %cst_4 = arith.constant 1.000000e-24 : f32
    %6 = vector.broadcast %cst_4 : f32 to vector<1x128xf32>
    %7 = arith.maximumf %5, %6 : vector<1x128xf32>
    %8 = math.rsqrt %7 : vector<1x128xf32>
    %cst_5 = arith.constant dense<0.000000e+00> : vector<8x128xf32>
    %9 = tpu.matmul %1, %2, %cst_5 {dimension_numbers = #tpu.dot_dimension_numbers<[1], [0], [0], [1], [0, 0, 1, 1], [], []>} : vector<8x32xf32>, vector<32x128xf32>, vector<8x128xf32> -> vector<8x128xf32>
    %10 = vector.broadcast %8 : vector<1x128xf32> to vector<8x128xf32>
    %11 = arith.mulf %9, %10 : vector<8x128xf32>
    %c0_6 = arith.constant 0 : index
    %c0_7 = arith.constant 0 : index
    %12 = vector.load %arg6[%c0_6, %c0_7] : memref<8x32xf32, #tpu.memory_space<vmem>>, vector<8x32xf32>
    %13 = arith.mulf %1, %1 : vector<8x32xf32>
    %cst_8 = arith.constant dense<0.000000e+00> : vector<8xf32>
    %14 = vector.multi_reduction <add>, %13, %cst_8 [1] : vector<8x32xf32> to vector<8xf32>
    %15 = vector.shape_cast %14 : vector<8xf32> to vector<8x1xf32>
    %16 = math.sqrt %15 : vector<8x1xf32>
    %17 = arith.mulf %12, %12 : vector<8x32xf32>
    %cst_9 = arith.constant dense<0.000000e+00> : vector<8xf32>
    %18 = vector.multi_reduction <add>, %17, %cst_9 [1] : vector<8x32xf32> to vector<8xf32>
    %19 = vector.shape_cast %18 : vector<8xf32> to vector<8x1xf32>
    %cst_10 = arith.constant 1.000000e-24 : f32
    %20 = vector.broadcast %cst_10 : f32 to vector<8x1xf32>
    %21 = arith.maximumf %19, %20 : vector<8x1xf32>
    %22 = math.rsqrt %21 : vector<8x1xf32>
    %23 = arith.mulf %1, %12 : vector<8x32xf32>
    %cst_11 = arith.constant dense<0.000000e+00> : vector<8xf32>
    %24 = vector.multi_reduction <add>, %23, %cst_11 [1] : vector<8x32xf32> to vector<8xf32>
    %25 = vector.shape_cast %24 : vector<8xf32> to vector<8x1xf32>
    %26 = arith.mulf %25, %22 : vector<8x1xf32>
    %cst_12 = arith.constant 1.000000e-10 : f32
    %27 = vector.broadcast %cst_12 : f32 to vector<8x1xf32>
    %28 = arith.addf %16, %27 : vector<8x1xf32>
    %29 = arith.divf %26, %28 : vector<8x1xf32>
    %30 = arith.mulf %29, %29 : vector<8x1xf32>
    %31 = arith.mulf %30, %30 : vector<8x1xf32>
    %cst_13 = arith.constant 8.000000e+00 : f32
    %32 = vector.broadcast %cst_13 : f32 to vector<8x1xf32>
    %33 = arith.mulf %32, %31 : vector<8x1xf32>
    %34 = arith.mulf %29, %29 : vector<8x1xf32>
    %cst_14 = arith.constant 8.000000e+00 : f32
    %35 = vector.broadcast %cst_14 : f32 to vector<8x1xf32>
    %36 = arith.mulf %35, %34 : vector<8x1xf32>
    %37 = arith.subf %33, %36 : vector<8x1xf32>
    %cst_15 = arith.constant 1.000000e+00 : f32
    %38 = vector.broadcast %cst_15 : f32 to vector<8x1xf32>
    %39 = arith.addf %37, %38 : vector<8x1xf32>
    %cst_16 = arith.constant -0.99999988 : f32
    %cst_17 = arith.constant 0.99999988 : f32
    %40 = vector.broadcast %cst_16 : f32 to vector<8x1xf32>
    %41 = arith.maximumf %40, %29 : vector<8x1xf32>
    %42 = vector.broadcast %cst_17 : f32 to vector<8x1xf32>
    %43 = arith.minimumf %42, %41 : vector<8x1xf32>
    %cst_18 = arith.constant 0.000000e+00 : f32
    %44 = vector.broadcast %cst_18 : f32 to vector<8x1xf32>
    %cst_19 = arith.constant 0.707106769 : f32
    %45 = vector.broadcast %cst_19 : f32 to vector<8x1xf32>
    %46 = arith.cmpf ole, %43, %45 : vector<8x1xf32>
    %47 = arith.extui %46 : vector<8x1xi1> to vector<8x1xi32>
    %48 = arith.sitofp %47 : vector<8x1xi32> to vector<8x1xf32>
    %49 = arith.addf %44, %48 : vector<8x1xf32>
    %cst_20 = arith.constant 6.12323426E-17 : f32
    %50 = vector.broadcast %cst_20 : f32 to vector<8x1xf32>
    %51 = arith.cmpf ole, %43, %50 : vector<8x1xf32>
    %52 = arith.extui %51 : vector<8x1xi1> to vector<8x1xi32>
    %53 = arith.sitofp %52 : vector<8x1xi32> to vector<8x1xf32>
    %54 = arith.addf %49, %53 : vector<8x1xf32>
    %cst_21 = arith.constant -0.707106769 : f32
    %55 = vector.broadcast %cst_21 : f32 to vector<8x1xf32>
    %56 = arith.cmpf ole, %43, %55 : vector<8x1xf32>
    %57 = arith.extui %56 : vector<8x1xi1> to vector<8x1xi32>
    %58 = arith.sitofp %57 : vector<8x1xi32> to vector<8x1xf32>
    %59 = arith.addf %54, %58 : vector<8x1xf32>
    %cst_22 = arith.constant 2.000000e+00 : f32
    %60 = vector.broadcast %cst_22 : f32 to vector<8x1xf32>
    %61 = arith.remf %59, %60 : vector<8x1xf32>
    %cst_23 = arith.constant 0.000000e+00 : f32
    %62 = vector.broadcast %cst_23 : f32 to vector<8x1xf32>
    %63 = arith.cmpf one, %61, %62 : vector<8x1xf32>
    %cst_24 = arith.constant 0.000000e+00 : f32
    %64 = vector.broadcast %cst_24 : f32 to vector<8x1xf32>
    %65 = arith.cmpf olt, %61, %64 : vector<8x1xf32>
    %cst_25 = arith.constant 0.000000e+00 : f32
    %66 = arith.cmpf olt, %cst_22, %cst_25 : f32
    %67 = vector.broadcast %66 : i1 to vector<8x1xi1>
    %68 = vector.broadcast %67 : vector<8x1xi1> to vector<8x1xi1>
    %69 = arith.xori %65, %68 : vector<8x1xi1>
    %70 = arith.andi %69, %63 : vector<8x1xi1>
    %71 = vector.broadcast %cst_22 : f32 to vector<8x1xf32>
    %72 = arith.addf %61, %71 : vector<8x1xf32>
    %73 = arith.select %70, %72, %61 : vector<8x1xi1>, vector<8x1xf32>
    %cst_26 = arith.constant 2.000000e+00 : f32
    %74 = vector.broadcast %cst_26 : f32 to vector<8x1xf32>
    %75 = arith.mulf %74, %73 : vector<8x1xf32>
    %cst_27 = arith.constant 1.000000e+00 : f32
    %76 = vector.broadcast %cst_27 : f32 to vector<8x1xf32>
    %77 = arith.subf %76, %75 : vector<8x1xf32>
    %78 = arith.mulf %77, %39 : vector<8x1xf32>
    %cst_28 = arith.constant 2.000000e+00 : f32
    %79 = vector.broadcast %cst_28 : f32 to vector<8x1xf32>
    %80 = arith.mulf %79, %59 : vector<8x1xf32>
    %81 = arith.subf %78, %80 : vector<8x1xf32>
    %82 = arith.mulf %16, %81 : vector<8x1xf32>
    %83 = vector.broadcast %0 : f32 to vector<8x1xf32>
    %84 = arith.mulf %83, %16 : vector<8x1xf32>
    %85 = arith.mulf %84, %29 : vector<8x1xf32>
    %86 = arith.addf %82, %85 : vector<8x1xf32>
    %cst_29 = arith.constant 1.000000e+00 : f32
    %87 = arith.addf %cst_29, %0 : f32
    %88 = vector.broadcast %87 : f32 to vector<8x1xf32>
    %89 = arith.divf %86, %88 : vector<8x1xf32>
    %90 = tpu.iota {dimensions = array<i32: 1>} : vector<8x128xi32>
    %c128_i32 = arith.constant 128 : i32
    %91 = arith.muli %arg1, %c128_i32 : i32
    %92 = vector.broadcast %91 : i32 to vector<8x128xi32>
    %93 = arith.addi %90, %92 : vector<8x128xi32>
    %c0_30 = arith.constant 0 : index
    %c0_31 = arith.constant 0 : index
    %94 = vector.load %arg3[%c0_30, %c0_31] : memref<8x1xi32, #tpu.memory_space<vmem>>, vector<8x1xi32>
    %95 = vector.broadcast %94 : vector<8x1xi32> to vector<8x128xi32>
    %96 = arith.cmpi eq, %93, %95 : vector<8x128xi32>
    %97 = vector.shape_cast %89 : vector<8x1xf32> to vector<8x1xf32>
    %98 = vector.broadcast %97 : vector<8x1xf32> to vector<8x128xf32>
    %99 = arith.select %96, %98, %11 : vector<8x128xi1>, vector<8x128xf32>
    %c0_32 = arith.constant 0 : index
    %c0_33 = arith.constant 0 : index
    %100 = vector.load %arg7[%c0_32, %c0_33] : memref<8x128xf32, #tpu.memory_space<vmem>>, vector<8x128xf32>
    tpu.vector_store %arg7[%c0_32, %c0_33], %99 {strides = array<i32>} : memref<8x128xf32, #tpu.memory_space<vmem>>, vector<8x128xf32>,
    return
  }
  func.func @transform_0(%arg0: i32, %arg1: i32) -> i32 {
    %c0_i32 = arith.constant 0 : i32
    %c0_i32_0 = arith.constant 0 : i32
    return %c0_i32 : i32
  }
  func.func @transform_1(%arg0: i32, %arg1: i32) -> (i32, i32) {
    %c0_i32 = arith.constant 0 : i32
    %c0_i32_0 = arith.constant 0 : i32
    return %arg0, %c0_i32 : i32, i32
  }
  func.func @transform_2(%arg0: i32, %arg1: i32) -> (i32, i32) {
    %c0_i32 = arith.constant 0 : i32
    %c0_i32_0 = arith.constant 0 : i32
    return %arg0, %c0_i32 : i32, i32
  }
  func.func @transform_3(%arg0: i32, %arg1: i32) -> (i32, i32) {
    %c0_i32 = arith.constant 0 : i32
    %c0_i32_0 = arith.constant 0 : i32
    return %c0_i32, %arg1 : i32, i32
  }
  func.func @transform_4(%arg0: i32, %arg1: i32) -> (i32, i32) {
    %c0_i32 = arith.constant 0 : i32
    %c0_i32_0 = arith.constant 0 : i32
    return %arg0, %c0_i32 : i32, i32
  }
  func.func @transform_5(%arg0: i32, %arg1: i32) -> (i32, i32) {
    %c0_i32 = arith.constant 0 : i32
    return %arg0, %arg1 : i32, i32
  }
}

</mosaic_0001>

<llo_original>
// kernel: tpu_custom_call.1
$region0: #{tpu_custom_call.1}
  #allocation0 [shape = 'u32[]', space=smem, size = 0x4, offset = 0x4, fixed_abs, tag = 'smem constant byte address 0x4 - core index']
  #allocation1 [shape = 'u32[144,128]{1,0:T(1,128)}', space=vmem, size = 0x12000, scoped, tag = 'internal scratch']
  #allocation2 [shape = 'f32[1]{0:T(128)S(6)}', space=smem, size = 0x200, scoped, tag = 'scoped memory for tpu_custom_call.1']
  %s0 = inlined_call_operand.<no memory space> [shape: f32[1], index: 0, kind: input, shape index: {}]
  %s1 = inlined_call_operand.vmem [shape: s32[16,1], index: 1, kind: input, shape index: {}]
  %s2 = inlined_call_operand.vmem [shape: f32[16,32], index: 2, kind: input, shape index: {}]
  %s3 = inlined_call_operand.hbm [shape: f32[32,384], index: 3, kind: input, shape index: {}]
  %s4 = inlined_call_operand.vmem [shape: f32[16,32], index: 4, kind: input, shape index: {}]
  %s5 = inlined_call_operand.hbm [shape: f32[16,384], index: 5, kind: output, shape index: {}]
  %s6 = sld [smem:[#allocation0]]
  $region57: #{tpu_custom_call.1} parent=0
    _
  %s8 = ssub.s32 1, %s6
  %s9 = scalar_select 0, %s8, %s6
  %10 = sst [smem:[#allocation2]] %s0
  $region1: #{tpu_custom_call.1} parent=0
    #allocation3 [shape = 'u8[32768]{0}', space=vmem, size = 0x8000, scoped, tag = 'input window, operand 3']
    #allocation4 [shape = 's32[2]{0}', space=sflag, size = 0x8, scoped, tag = 'scoped memory for tpu_custom_call.1']
    #allocation5 [shape = 's32[2]{0}', space=sflag, size = 0x8, scoped, tag = 'scoped memory for tpu_custom_call.1']
    #allocation6 [shape = 'u8[8192]{0}', space=vmem, size = 0x2000, scoped, tag = 'output window, operand 0']
    %11 = vsyncpa [#allocation4], 0
    %s12 = scalar_lea.sflag [#allocation4], 1
    %13 = vsyncpa %s12, 0
    %14 = vsyncpa [#allocation5], 0
    %s15 = scalar_lea.sflag [#allocation5], 1
    %16 = vsyncpa %s15, 0
    loop: start=0, step=1, limit=8
    $region2: #{tpu_custom_call.1} parent=1 // loop_pre_header
      _
    $region3: #{tpu_custom_call.1} parent=1 // loop_header
      %s18 = sphi 0, %s22
      %p19 = scmp.ge.s32.totalorder %s18, 8
      %s25 = sphi 0, %s37
      %s26 = sphi 0, %s33
      %s27 = sphi 0, %s25
      %s28 = sphi 0, %s26
      %s29 = sphi 0, %s27
      %s30 = sphi 0, %s28
      %s38 = sphi 0, %s38
      %s40 = sphi 0, %s38
      %s41 = sphi 0, %s40
      %s55 = sphi 0, %s41
      %s61 = sphi 0, %s63
      %s64 = sphi 0, %s61
      %s65 = sphi 0, %s64
      %s81 = sphi 0, %s65
      %s87 = sphi 0, %s89
      %s90 = sphi 0, %s87
      %s91 = sphi 0, %s90
      %s107 = sphi 0, %s91
      %s113 = sphi 0, %s115
      %s116 = sphi 0, %s113
      %s117 = sphi 0, %s116
      %s133 = sphi 0, %s117
      %s139 = sphi 0, %s141
      %s142 = sphi 0, %s139
      %s143 = sphi 0, %s142
      %s159 = sphi 0, %s143
      %s167 = sphi 0, %s169
      %s170 = sphi 0, %s167
      %s171 = sphi 0, %s170
      %s187 = sphi 0, %s171
    $region4: #{tpu_custom_call.1} parent=1 // loop_header_branch
      %21 = sbr.rel (%p19) target = $region8
    $region5: #{tpu_custom_call.1} parent=1 // loop_body
      %s23 = ssub.s32 %s18, 1
      %s24 = ssub.s32 %s18, 2
      %s31 = sadd.s32 1, %s26
      %p32 = scmp.ge.s32.totalorder %s31, 3
      %s33 = scalar_select %p32, 0, %s31
      %s34 = sadd.s32 1, %s25
      %s35 = scalar_select %p32, %s34, %s25
      %p36 = scmp.ge.s32.totalorder %s35, 2
      %s37 = scalar_select %p36, 0, %s35
      %s39 = sadd.s32 %s38, 1
      %p42 = scmp.eq.s32.totalorder %s18, 5
      %p43 = scmp.ne.s32.totalorder %s38, %s40
      %p44 = scmp.eq.s32.totalorder %s18, 0
      %p45 = por %p43, %p44
      %p46 = scmp.ne.s32.totalorder %s38, %s40
      %p47 = scmp.eq.s32.totalorder %s23, 5
      %p48 = por %p46, %p47
      %p49 = scmp.ne.s32.totalorder %s40, %s41
      %p50 = scmp.eq.s32.totalorder %s23, 0
      %p51 = por %p49, %p50
      %p52 = scmp.ne.s32.totalorder %s40, %s41
      %p53 = scmp.eq.s32.totalorder %s24, 5
      %p54 = por %p52, %p53
      %p56 = scmp.ne.s32.totalorder %s41, %s55
      %p57 = scmp.eq.s32.totalorder %s24, 0
      %p58 = por %p56, %p57
      %s59 = ssub.s32 %s25, %s37
      %p60 = scmp.eq.s32.totalorder %s59, 0
      %s62 = sadd.s32 %s61, 1
      %s63 = scalar_select %p60, %s61, %s62
      %p66 = pneg %p60
      %p67 = scmp.eq.s32.totalorder %s18, 5
      %p68 = por %p66, %p67
      %p69 = scmp.ne.s32.totalorder %s61, %s64
      %p70 = scmp.eq.s32.totalorder %s18, 0
      %p71 = por %p69, %p70
      %p72 = scmp.ne.s32.totalorder %s61, %s64
      %p73 = scmp.eq.s32.totalorder %s23, 5
      %p74 = por %p72, %p73
      %p75 = scmp.ne.s32.totalorder %s64, %s65
      %p76 = scmp.eq.s32.totalorder %s23, 0
      %p77 = por %p75, %p76
      %p78 = scmp.ne.s32.totalorder %s64, %s65
      %p79 = scmp.eq.s32.totalorder %s24, 5
      %p80 = por %p78, %p79
      %p82 = scmp.ne.s32.totalorder %s65, %s81
      %p83 = scmp.eq.s32.totalorder %s24, 0
      %p84 = por %p82, %p83
      %s85 = ssub.s32 %s25, %s37
      %p86 = scmp.eq.s32.totalorder %s85, 0
      %s88 = sadd.s32 %s87, 1
      %s89 = scalar_select %p86, %s87, %s88
      %p92 = pneg %p86
      %p93 = scmp.eq.s32.totalorder %s18, 5
      %p94 = por %p92, %p93
      %p95 = scmp.ne.s32.totalorder %s87, %s90
      %p96 = scmp.eq.s32.totalorder %s18, 0
      %p97 = por %p95, %p96
      %p98 = scmp.ne.s32.totalorder %s87, %s90
      %p99 = scmp.eq.s32.totalorder %s23, 5
      %p100 = por %p98, %p99
      %p101 = scmp.ne.s32.totalorder %s90, %s91
      %p102 = scmp.eq.s32.totalorder %s23, 0
      %p103 = por %p101, %p102
      %p104 = scmp.ne.s32.totalorder %s90, %s91
      %p105 = scmp.eq.s32.totalorder %s24, 5
      %p106 = por %p104, %p105
      %p108 = scmp.ne.s32.totalorder %s91, %s107
      %p109 = scmp.eq.s32.totalorder %s24, 0
      %p110 = por %p108, %p109
      %s111 = ssub.s32 %s26, %s33
      %p112 = scmp.eq.s32.totalorder %s111, 0
      %s114 = sadd.s32 %s113, 1
      %s115 = scalar_select %p112, %s113, %s114
      %p118 = pneg %p112
      %p119 = scmp.eq.s32.totalorder %s18, 5
      %p120 = por %p118, %p119
      %p121 = scmp.ne.s32.totalorder %s113, %s116
      %p122 = scmp.eq.s32.totalorder %s18, 0
      %p123 = por %p121, %p122
      %p124 = scmp.ne.s32.totalorder %s113, %s116
      %p125 = scmp.eq.s32.totalorder %s23, 5
      %p126 = por %p124, %p125
      %p127 = scmp.ne.s32.totalorder %s116, %s117
      %p128 = scmp.eq.s32.totalorder %s23, 0
      %p129 = por %p127, %p128
      %p130 = scmp.ne.s32.totalorder %s116, %s117
      %p131 = scmp.eq.s32.totalorder %s24, 5
      %p132 = por %p130, %p131
      %p134 = scmp.ne.s32.totalorder %s117, %s133
      %p135 = scmp.eq.s32.totalorder %s24, 0
      %p136 = por %p134, %p135
      %s137 = ssub.s32 %s25, %s37
      %p138 = scmp.eq.s32.totalorder %s137, 0
      %s140 = sadd.s32 %s139, 1
      %s141 = scalar_select %p138, %s139, %s140
      %p144 = pneg %p138
      %p145 = scmp.eq.s32.totalorder %s18, 5
      %p146 = por %p144, %p145
      %p147 = scmp.ne.s32.totalorder %s139, %s142
      %p148 = scmp.eq.s32.totalorder %s18, 0
      %p149 = por %p147, %p148
      %p150 = scmp.ne.s32.totalorder %s139, %s142
      %p151 = scmp.eq.s32.totalorder %s23, 5
      %p152 = por %p150, %p151
      %p153 = scmp.ne.s32.totalorder %s142, %s143
      %p154 = scmp.eq.s32.totalorder %s23, 0
      %p155 = por %p153, %p154
      %p156 = scmp.ne.s32.totalorder %s142, %s143
      %p157 = scmp.eq.s32.totalorder %s24, 5
      %p158 = por %p156, %p157
      %p160 = scmp.ne.s32.totalorder %s143, %s159
      %p161 = scmp.eq.s32.totalorder %s24, 0
      %p162 = por %p160, %p161
      %s163 = ssub.s32 %s25, %s37
      %s164 = ssub.s32 %s26, %s33
      %s165 = sor.u32 %s163, %s164
      %p166 = scmp.eq.s32.totalorder %s165, 0
      %s168 = sadd.s32 %s167, 1
      %s169 = scalar_select %p166, %s167, %s168
      %p172 = pneg %p166
      %p173 = scmp.eq.s32.totalorder %s18, 5
      %p174 = por %p172, %p173
      %p175 = scmp.ne.s32.totalorder %s167, %s170
      %p176 = scmp.eq.s32.totalorder %s18, 0
      %p177 = por %p175, %p176
      %p178 = scmp.ne.s32.totalorder %s167, %s170
      %p179 = scmp.eq.s32.totalorder %s23, 5
      %p180 = por %p178, %p179
      %p181 = scmp.ne.s32.totalorder %s170, %s171
      %p182 = scmp.eq.s32.totalorder %s23, 0
      %p183 = por %p181, %p182
      %p184 = scmp.ne.s32.totalorder %s170, %s171
      %p185 = scmp.eq.s32.totalorder %s24, 5
      %p186 = por %p184, %p185
      %p188 = scmp.ne.s32.totalorder %s171, %s187
      %p189 = scmp.eq.s32.totalorder %s24, 0
      %p190 = por %p188, %p189
      %p191 = scmp.le.s32.totalorder 1, %s18
      %p192 = scmp.lt.s32.totalorder %s18, 7
      %p193 = pnand %p191, %p192
      %p194 = pneg %p193
      // Predicated region
      $region9: #{tpu_custom_call.1} parent=5 // pred_check
        _
      $region10: #{tpu_custom_call.1} parent=5 // pred_check_branch
        %196 = sbr.rel (%p193) target = $region12
      $region11: #{tpu_custom_call.1} parent=5 // pred_region
        %s197 = ssub.s32 %s18, 1
        // Predicated region
        $region13: #{tpu_custom_call.1} parent=11 // pred_check
          %p198 = pneg %p51
        $region14: #{tpu_custom_call.1} parent=11 // pred_check_branch
          %200 = sbr.rel (%p198) target = $region16
        $region15: #{tpu_custom_call.1} parent=11 // pred_region
          _
        $region16: #{tpu_custom_call.1} parent=11 // pred_fallthru
          _
      $region12: #{tpu_custom_call.1} parent=5 // pred_fallthru
        _
      %p201 = scmp.lt.s32.totalorder %s18, 6
      // Predicated region
      $region17: #{tpu_custom_call.1} parent=5 // pred_check
        %p202 = pneg %p201
      $region18: #{tpu_custom_call.1} parent=5 // pred_check_branch
        %204 = sbr.rel (%p202) target = $region20
      $region19: #{tpu_custom_call.1} parent=5 // pred_region
        // Predicated region
        $region21: #{tpu_custom_call.1} parent=19 // pred_check
          %p205 = pneg %p71
        $region22: #{tpu_custom_call.1} parent=19 // pred_check_branch
          %207 = sbr.rel (%p205) target = $region24
        $region23: #{tpu_custom_call.1} parent=19 // pred_region
          %p208 = scmp.lt.s32.totalorder %s25, 1
          %s209 = scalar_select %p208, %s25, 1
          %s210 = smul.addr %s209, 8
          %s211 = scalar_lea.vmem %s1, %s210
        $region24: #{tpu_custom_call.1} parent=19 // pred_fallthru
          _
        // Predicated region
        $region25: #{tpu_custom_call.1} parent=19 // pred_check
          %p212 = pneg %p97
        $region26: #{tpu_custom_call.1} parent=19 // pred_check_branch
          %214 = sbr.rel (%p212) target = $region28
        $region27: #{tpu_custom_call.1} parent=19 // pred_region
          %p215 = scmp.lt.s32.totalorder %s25, 1
          %s216 = scalar_select %p215, %s25, 1
          %s217 = smul.addr %s216, 8
          %s218 = scalar_lea.vmem %s2, %s217
        $region28: #{tpu_custom_call.1} parent=19 // pred_fallthru
          _
        // Predicated region
        $region29: #{tpu_custom_call.1} parent=19 // pred_check
          %p219 = pneg %p123
        $region30: #{tpu_custom_call.1} parent=19 // pred_check_branch
          %221 = sbr.rel (%p219) target = $region32
        $region31: #{tpu_custom_call.1} parent=19 // pred_region
          %s222 = sand.u32 %s113, 1
          %s223 = scalar_lea.sflag [#allocation4], %s222
          %s224 = sand.u32 %s113, 1
          %s225 = smul.addr %s224, 32
          %s226 = scalar_lea.vmem [#allocation3], %s225
          %s228 = ssub.s32 512, 512
          %229 = vsyncadd %s223, %s228
          %s230 = smul.addr %s26, 128
          %s231 = scalar_lea.hbm %s3, %s230
          %s232 = sshll.u32 %s226, 4
          %s233 = int_to_ptr.vmem [resolvable:$true] %s232
          %238 = dma.hbm_to_vmem [thread:$0]  %s231, 512, %s233, %s223, 384, 128, 8
        $region32: #{tpu_custom_call.1} parent=19 // pred_fallthru
          _
        // Predicated region
        $region33: #{tpu_custom_call.1} parent=19 // pred_check
          %p239 = pneg %p149
        $region34: #{tpu_custom_call.1} parent=19 // pred_check_branch
          %241 = sbr.rel (%p239) target = $region36
        $region35: #{tpu_custom_call.1} parent=19 // pred_region
          %p242 = scmp.lt.s32.totalorder %s25, 1
          %s243 = scalar_select %p242, %s25, 1
          %s244 = smul.addr %s243, 8
          %s245 = scalar_lea.vmem %s4, %s244
        $region36: #{tpu_custom_call.1} parent=19 // pred_fallthru
          _
      $region20: #{tpu_custom_call.1} parent=5 // pred_fallthru
        _
      %p246 = scmp.le.s32.totalorder 1, %s18
      %p247 = scmp.lt.s32.totalorder %s18, 7
      %p248 = pnand %p246, %p247
      %p249 = pneg %p248
      // Predicated region
      $region37: #{tpu_custom_call.1} parent=5 // pred_check
        _
      $region38: #{tpu_custom_call.1} parent=5 // pred_check_branch
        %251 = sbr.rel (%p248) target = $region40
      $region39: #{tpu_custom_call.1} parent=5 // pred_region
        %s252 = ssub.s32 %s18, 1
        %s253 = sand.u32 %s116, 1
        %s254 = scalar_lea.sflag [#allocation4], %s253
        %s255 = sand.u32 %s116, 1
        %s256 = smul.addr %s255, 32
        %s257 = scalar_lea.vmem [#allocation3], %s256
        // Predicated region
        $region41: #{tpu_custom_call.1} parent=39 // pred_check
          %p258 = pneg %p129
        $region42: #{tpu_custom_call.1} parent=39 // pred_check_branch
          %260 = sbr.rel (%p258) target = $region44
        $region43: #{tpu_custom_call.1} parent=39 // pred_region
          %261 = dma.done %s254, 512
        $region44: #{tpu_custom_call.1} parent=39 // pred_fallthru
          _
        %p262 = pneg %p51
        %p263 = pneg %p48
        %p264 = scmp.lt.s32.totalorder %s27, 1
        %s265 = scalar_select %p264, %s27, 1
        %s266 = smul.addr %s265, 8
        %s267 = scalar_lea.vmem %s1, %s266
        %p268 = pneg %p77
        %p269 = pneg %p74
        %p270 = scmp.lt.s32.totalorder %s27, 1
        %s271 = scalar_select %p270, %s27, 1
        %s272 = smul.addr %s271, 8
        %s273 = scalar_lea.vmem %s2, %s272
        %p274 = pneg %p103
        %p275 = pneg %p100
        %s276 = sand.u32 %s116, 1
        %s277 = scalar_lea.sflag [#allocation4], %s276
        %s278 = sand.u32 %s116, 1
        %s279 = smul.addr %s278, 32
        %s280 = scalar_lea.vmem [#allocation3], %s279
        %p281 = pneg %p129
        %p282 = pneg %p126
        %p283 = scmp.lt.s32.totalorder %s27, 1
        %s284 = scalar_select %p283, %s27, 1
        %s285 = smul.addr %s284, 8
        %s286 = scalar_lea.vmem %s4, %s285
        %p287 = pneg %p155
        %p288 = pneg %p152
        %p289 = pneg %p183
        %p290 = pneg %p180
        %s291 = sand.u32 %s170, 1
        %s292 = scalar_lea.sflag [#allocation5], %s291
        %s293 = sand.u32 %s170, 1
        %s294 = smul.addr %s293, 8
        %s295 = scalar_lea.vmem [#allocation6], %s294
        %p296 = scmp.lt.s32.totalorder %s27, 1
        %s297 = scalar_select %p296, %s27, 1
        %s298 = smul.addr %s297, 8
        %s299 = scalar_lea.vmem %s1, %s298
        %p300 = scmp.lt.s32.totalorder %s27, 1
        %s301 = scalar_select %p300, %s27, 1
        %s302 = smul.addr %s301, 8
        %s303 = scalar_lea.vmem %s2, %s302
        %p304 = scmp.lt.s32.totalorder %s27, 1
        %s305 = scalar_select %p304, %s27, 1
        %s306 = smul.addr %s305, 8
        %s307 = scalar_lea.vmem %s4, %s306
        %s308 = sld [smem:[#allocation2]]
        %v309 = vld [vmem:[%s303] sm:$0xff]
        %v310 = vld [vmem:[%s257] sm:$0xff]
        %v311 = vld [vmem:[%s257 + $0x8] sm:$0xff]
        %v312 = vld [vmem:[%s257 + $0x10] sm:$0xff]
        %v313 = vld [vmem:[%s257 + $0x18] sm:$0xff]
        %v314 = vmul.f32 %v310, %v310
        %v315 = vmul.f32 %v311, %v311
        %v316 = vmul.f32 %v312, %v312
        %v317 = vmul.f32 %v313, %v313
        %v318 = vadd.f32 %v314, %v315
        %v319 = vadd.f32 %v318, %v316
        %v320 = vadd.f32 %v319, %v317
        %v321 = vrot.slane %v320, 4
        %v322 = vadd.f32 %v320, %v321
        %v323 = vrot.slane %v322, 2
        %v324 = vadd.f32 %v322, %v323
        %v325 = vrot.slane %v324, 1
        %v326 = vadd.f32 %v324, %v325
        %v327 = vmax.f32 %v326, 1e-24
        %v328 = vrsqrt.pop %v327
        %vm329 = vcmask 261120
        %v331 = vsel %vm329, %v309, 0
        %333 = vmatprep.subr.mxu0 0.0
        %334 = vmatpush1.msra.mxu0 %v310
        %335 = vmatprep.subr.mxu0 0.0
        %336 = vmatpush1.msra.mxu0 %v311
        %337 = vmatprep.subr.mxu0 0.0
        %338 = vmatpush1.msra.mxu0 %v312
        %339 = vmatprep.subr.mxu0 0.0
        %340 = vmatpush1.msra.mxu0 %v313
        %341 = vmatprep.subr.mxu0 0.0
        %342 = vmatpush1.msra.mxu0 0.0
        %343 = vmatprep.subr.mxu0 0.0
        %344 = vmatpush1.msra.mxu0 0.0
        %345 = vmatprep.subr.mxu0 0.0
        %346 = vmatpush1.msra.mxu0 0.0
        %347 = vmatprep.subr.mxu0 0.0
        %348 = vmatpush1.msra.mxu0 0.0
        %349 = vmatprep.subr.mxu0 0.0
        %350 = vmatpush1.msra.mxu0 0.0
        %351 = vmatprep.subr.mxu0 0.0
        %352 = vmatpush1.msra.mxu0 0.0
        %353 = vmatprep.subr.mxu0 0.0
        %354 = vmatpush1.msra.mxu0 0.0
        %355 = vmatprep.subr.mxu0 0.0
        %356 = vmatpush1.msra.mxu0 0.0
        %357 = vmatprep.subr.mxu0 0.0
        %358 = vmatpush1.msra.mxu0 0.0
        %359 = vmatprep.subr.mxu0 0.0
        %360 = vmatpush1.msra.mxu0 0.0
        %361 = vmatprep.subr.mxu0 0.0
        %362 = vmatpush1.msra.mxu0 0.0
        %363 = vmatprep.subr.mxu0 0.0
        %364 = vmatpush1.msra.mxu0 0.0
        %365 = vmatprep.subr.mxu0 0.0
        %366 = vmatpush1.msra.mxu0 0.0
        %367 = vmatprep.subr.mxu0 0.0
        %368 = vmatpush1.msra.mxu0 0.0
        %369 = vmatprep.subr.mxu0 0.0
        %370 = vmatpush1.msra.mxu0 0.0
        %371 = vmatprep.subr.mxu0 0.0
        %372 = vmatpush1.msra.mxu0 0.0
        %373 = vmatprep.subr.mxu0 0.0
        %374 = vmatpush1.msra.mxu0 0.0
        %375 = vmatprep.subr.mxu0 0.0
        %376 = vmatpush1.msra.mxu0 0.0
        %377 = vmatprep.subr.mxu0 0.0
        %378 = vmatpush1.msra.mxu0 0.0
        %379 = vmatprep.subr.mxu0 0.0
        %380 = vmatpush1.msra.mxu0 0.0
        %381 = vmatprep.subr.mxu0 0.0
        %382 = vmatpush1.msra.mxu0 0.0
        %383 = vmatprep.subr.mxu0 0.0
        %384 = vmatpush1.msra.mxu0 0.0
        %385 = vmatprep.subr.mxu0 0.0
        %386 = vmatpush1.msra.mxu0 0.0
        %387 = vmatprep.subr.mxu0 0.0
        %388 = vmatpush1.msra.mxu0 0.0
        %389 = vmatprep.subr.mxu0 0.0
        %390 = vmatpush1.msra.mxu0 0.0
        %391 = vmatprep.subr.mxu0 0.0
        %392 = vmatpush1.msra.mxu0 0.0
        %393 = vmatprep.subr.mxu0 0.0
        %394 = vmatpush1.msra.mxu0 0.0
        %395 = vmatprep.subr.mxu0 0.0
        %396 = vmatpush1.msra.mxu0 0.0
        %397 = vmatprep.mubr.f32.mxu0 0.0
        %398 = vmatmul.mubr.f32.gmra.mrb[0].mxu0 %v331
        %v399 = vpop.f32.mrb[0].mxu0
        %v400 = vadd.f32 0.0, %v399
        %v401 = vpop.f32.mrb[0].mxu0
        %402 = vdwg.mxu0
        %v403 = vmul.f32 %v400, %v328
        %v404 = vld [vmem:[%s307] sm:$0xff]
        %v405 = vmul.f32 %v309, %v309
        %v406 = vsel %vm329, %v405, 0.0
        %407 = vadd.xlane.f32.xlu0 %v406
        %v408 = vpop.xlane.xlu0 %407
        %v409 = vrsqrt.pop %v408
        %v410 = vmul.f32 %v408, %v409
        %vm411 = vcmp.eq.f32.partialorder %v408, inf
        %v412 = vsel %vm411, %v408, %v410
        %vm413 = vcmp.eq.f32.partialorder %v408, 0.0
        %v414 = vand.u32 %v408, 2147483648
        %v415 = vsel %vm413, %v414, %v412
        %v416 = vmul.f32 %v404, %v404
        %v417 = vsel %vm329, %v416, 0.0
        %418 = vadd.xlane.f32.xlu0 %v417
        %v419 = vpop.xlane.xlu0 %418
        %v420 = vmax.f32 %v419, 1e-24
        %v421 = vrsqrt.pop %v420
        %v422 = vmul.f32 %v309, %v404
        %v423 = vsel %vm329, %v422, 0.0
        %424 = vadd.xlane.f32.xlu0 %v423
        %v425 = vpop.xlane.xlu0 %424
        %v426 = vmul.f32 %v425, %v421
        %v427 = vadd.f32 %v415, 1e-10
        %v428 = vrcp.pop %v427
        %v429 = vmul.f32 %v426, %v428
        %v430 = vmul.f32 %v429, %v429
        %v431 = vmul.f32 %v430, %v430
        %v432 = vmul.f32 %v431, 8.0
        %v433 = vmul.f32 %v430, 8.0
        %v434 = vsub.f32 %v432, %v433
        %v435 = vadd.f32 %v434, 1.0
        %v436 = vmax.f32 %v429, -0.9999999
        %v437 = vmin.f32 %v436, 0.9999999
        %vm438 = vcmp.le.f32.partialorder %v437, 0.70710677
        %v439 = vsel %vm438, 1, 0
        %v440 = vcvt.s32.f32 %v439
        %v441 = vadd.f32 %v440, 0.0
        %vm442 = vcmp.le.f32.partialorder %v437, 6.123234e-17
        %v443 = vsel %vm442, 1, 0
        %v444 = vcvt.s32.f32 %v443
        %v445 = vadd.f32 %v441, %v444
        %vm446 = vcmp.le.f32.partialorder %v437, -0.70710677
        %v447 = vsel %vm446, 1, 0
        %v448 = vcvt.s32.f32 %v447
        %v449 = vadd.f32 %v445, %v448
        %v450 = vand.u32 2147483647, %v449
        %v451 = vrcp.pop 2.0
        %v452 = vmul.f32 %v450, %v451
        %v453 = vfloor.f32 %v452
        %v454 = vmul.f32 %v453, 2.0
        %v455 = vsub.f32 %v450, %v454
        %vm456 = vcmp.eq.f32.partialorder %v455, 2.0
        %v457 = vsel %vm456, 0.0, %v455
        %v458 = vand.u32 2147483647, %v457
        %v459 = vand.u32 %v449, 2147483648
        %v460 = vor.u32 %v458, %v459
        %vm461 = vcmp.ne.f32.partialorder %v460, 0.0
        %vm462 = vcmp.lt.f32.partialorder %v460, 0.0
        %vm463 = vmand %vm462, %vm461
        %v464 = vadd.f32 %v460, 2.0
        %v465 = vsel %vm463, %v464, %v460
        %v466 = vmul.f32 %v465, 2.0
        %v467 = vsub.f32 1.0, %v466
        %v468 = vmul.f32 %v467, %v435
        %v469 = vmul.f32 %v449, 2.0
        %v470 = vsub.f32 %v468, %v469
        %v471 = vmul.f32 %v415, %v470
        %v472 = vstv %s308
        %v473 = vmul.f32 %v472, %v415
        %v474 = vmul.f32 %v473, %v429
        %v475 = vadd.f32 %v471, %v474
        %s476 = sadd.f32 %s308, 1.0
        %v477 = vstv %s476
        %v478 = vrcp.pop %v477
        %v479 = vmul.f32 %v475, %v478
        %v480 = vlaneseq
        %v481 = vand.u32 %v480, 127
        %s482 = smul.u32 %s28, 128
        %v483 = vstv %s482
        %v484 = vadd.s32 %v481, %v483
        %v485 = vld [vmem:[%s299] sm:$0xff]
        %486 = vset.pattern.permute.xlu0 0
        %487 = vperm.xlu0 %486, %v485
        %v488 = vpop.permute.xlu0 %487
        %vm489 = vcmp.eq.s32.totalorder %v484, %v488
        %v490 = vsel %vm489, %v479, %v403
        %491 = vst [vmem:[%s295] sm:$0xff] %v490
        %s492 = sand.u32 %s170, 1
        %s493 = scalar_lea.sflag [#allocation5], %s492
        %s494 = sand.u32 %s170, 1
        %s495 = smul.addr %s494, 8
        %s496 = scalar_lea.vmem [#allocation6], %s495
        // Predicated region
        $region45: #{tpu_custom_call.1} parent=39 // pred_check
          %p497 = pneg %p180
        $region46: #{tpu_custom_call.1} parent=39 // pred_check_branch
          %499 = sbr.rel (%p497) target = $region48
        $region47: #{tpu_custom_call.1} parent=39 // pred_region
          %s501 = ssub.s32 128, 128
          %502 = vsyncadd %s493, %s501
          %s503 = smul.addr %s27, 3
          %s504 = sadd.s32 %s28, %s503
          %s505 = smul.addr %s504, 128
          %s506 = scalar_lea.hbm %s5, %s505
          %s508 = sshll.u32 %s496, 4
          %s509 = int_to_ptr.vmem [resolvable:$true] %s508
          %511 = dma.vmem_to_hbm [thread:$0]  %s509, 128, %s506, %s493
        $region48: #{tpu_custom_call.1} parent=39 // pred_fallthru
          _
      $region40: #{tpu_custom_call.1} parent=5 // pred_fallthru
        _
      %p512 = scmp.le.s32.totalorder 2, %s18
      // Predicated region
      $region49: #{tpu_custom_call.1} parent=5 // pred_check
        %p513 = pneg %p512
      $region50: #{tpu_custom_call.1} parent=5 // pred_check_branch
        %515 = sbr.rel (%p513) target = $region52
      $region51: #{tpu_custom_call.1} parent=5 // pred_region
        %s516 = ssub.s32 %s18, 2
        // Predicated region
        $region53: #{tpu_custom_call.1} parent=51 // pred_check
          %p517 = pneg %p186
        $region54: #{tpu_custom_call.1} parent=51 // pred_check_branch
          %519 = sbr.rel (%p517) target = $region56
        $region55: #{tpu_custom_call.1} parent=51 // pred_region
          %s520 = sand.u32 %s171, 1
          %s521 = scalar_lea.sflag [#allocation5], %s520
          %s522 = sand.u32 %s171, 1
          %s523 = smul.addr %s522, 8
          %s524 = scalar_lea.vmem [#allocation6], %s523
          %525 = dma.done %s521, 128
        $region56: #{tpu_custom_call.1} parent=51 // pred_fallthru
          _
      $region52: #{tpu_custom_call.1} parent=5 // pred_fallthru
        _
    $region6: #{tpu_custom_call.1} parent=1 // loop_footer
      %s22 = sadd.s32 1, %s18
    $region7: #{tpu_custom_call.1} parent=1 // loop_footer_branch
      %17 = sbr.rel target = $region3
    $region8: #{tpu_custom_call.1} parent=1 // loop_exit
      _
    %526 = vsyncpa [#allocation4], 1
    %s527 = scalar_lea.sflag [#allocation4], 1
    %528 = vsyncpa %s527, 1
    %529 = vsyncpa [#allocation5], 1
    %s530 = scalar_lea.sflag [#allocation5], 1
    %531 = vsyncpa %s530, 1

</llo_original>
